<compile_context>
chip_gen: v7x
topology: tpu7x:2x2x1
jax: 0.10.0
libtpu: 0.0.40
codegen_flags: <defaults>
</compile_context>

<pallas_src>
import jax
import jax.numpy as jnp
from jax.experimental import pallas as pl
from jax.experimental.pallas import tpu as pltpu

VISIBLE = 4
HIDDEN = [11, 6, 11]
BP_HID = 11
BP_OUT = 3
LANES = 128

# ---- packed parameter slab layout (rows x 128 lanes, f32) -------------------
# order: W0, c0, W1, c1, W2, c2, Wb1, bb1, Wb2, bb2
_W_ROWS = 128   # each weight zero-padded to (128, 128)
_B_ROWS = 8     # each bias zero-padded to (8, 128); data in row 0
_OFFSETS = []
_off = 0
for _ in range(5):
    _OFFSETS.append(_off); _off += _W_ROWS   # weight block
    _OFFSETS.append(_off); _off += _B_ROWS   # bias block
SLAB_ROWS = _off                              # 5 * (128 + 8) = 680 (multiple of 8)

_W_OFF = [_OFFSETS[2 * i] for i in range(5)]
_B_OFF = [_OFFSETS[2 * i + 1] for i in range(5)]


def _sigmoid(x):
    return 1.0 / (1.0 + jnp.exp(-x))


def dbn_kernel(x_ref,        # (TB, 128)   flattened+lane-padded input tile
               rand_ref,     # (4, TB, 128) uniforms: 3 Bernoulli draws + dropout
               params_ref,   # (SLAB_ROWS, 128) packed weights/biases
               out_ref):     # (TB, 128)   lane-dense output (first 3 lanes valid)

    def w(i):   # (128, 128) zero-padded weight, input dim along rows
        off = _W_OFF[i]
        return params_ref[off:off + _W_ROWS, :]

    def b(i):   # (1, 128) zero-padded bias
        off = _B_OFF[i]
        return params_ref[off:off + 1, :]

    v = x_ref[...]
    p = v

    # --- RBM stack: p = sigmoid(v @ W + c); v = bernoulli(p) -----------------
    for layer in range(3):
        p = _sigmoid(jnp.dot(v, w(layer), preferred_element_type=jnp.float32)
                     + b(layer))
        v = (rand_ref[layer] < p).astype(jnp.float32)

    # --- BPNN: Linear(11,11) -> ReLU -> Dropout(0.5, training) -> Linear(11,3)
    h = jnp.dot(p, w(3), preferred_element_type=jnp.float32) + b(3)
    h = jnp.maximum(h, 0.0)
    # training-mode dropout: mask and 1/(1-p) scale folded into one select
    h = h * jnp.where(rand_ref[3] < 0.5, 2.0, 0.0)
    out = jnp.dot(h, w(4), preferred_element_type=jnp.float32) + b(4)

    out_ref[...] = out.astype(out_ref.dtype)


def init_params(key):
    """Deterministic synthetic parameters (shapes from DBN.__init__)."""
    ks = jax.random.split(key, 8)
    sizes = [VISIBLE] + HIDDEN
    params = []
    # RBM weights (visible, hidden) and hidden biases c
    for i in range(len(HIDDEN)):
        w = jax.random.normal(ks[i], (sizes[i], sizes[i + 1]), jnp.float32) * 0.1
        c = jnp.zeros((1, sizes[i + 1]), jnp.float32)
        params += [w, c]
    # BPNN Linear layers (stored pre-transposed as (in, out) == x @ W.T + b)
    b1 = 1.0 / float(jnp.sqrt(11.0))
    wb1 = jax.random.uniform(ks[3], (11, BP_HID), jnp.float32, -b1, b1)
    bb1 = jax.random.uniform(ks[4], (1, BP_HID), jnp.float32, -b1, b1)
    b2 = 1.0 / float(jnp.sqrt(11.0))
    wb2 = jax.random.uniform(ks[5], (BP_HID, BP_OUT), jnp.float32, -b2, b2)
    bb2 = jax.random.uniform(ks[6], (1, BP_OUT), jnp.float32, -b2, b2)
    params += [wb1, bb1, wb2, bb2]
    return tuple(params)


def pack_params(params):
    """Pack all weights/biases into one (SLAB_ROWS, 128) f32 slab (built once)."""
    slab = jnp.zeros((SLAB_ROWS, LANES), jnp.float32)
    for i, a in enumerate(params):
        off = _OFFSETS[i]
        r, c = a.shape
        slab = slab.at[off:off + r, :c].set(a.astype(jnp.float32))
    return slab


def dbn_forward(x, param_slab, key, tile_b=256):
    B = x.shape[0]
    x2d = x.reshape(B, -1).astype(jnp.float32)            # v.view((B, -1)).float()
    assert x2d.shape[1] == VISIBLE, "input must flatten to visible_units=4"
    x_pad = jnp.zeros((B, LANES), jnp.float32).at[:, :VISIBLE].set(x2d)

    # all randomness drawn once, outside the kernel (3 Bernoulli + 1 dropout mask)
    # TODO(synk): could use pltpu.prng_* on real TPU; avoided here because the
    # interpret/CPU path has no lowering for those primitives.
    rand = jax.random.uniform(key, (4, B, LANES), dtype=jnp.float32)

    TB = B if B <= tile_b else tile_b
    assert B % TB == 0 and (TB % 8 == 0 or TB == B)
    grid = (B // TB,)

    out = pl.pallas_call(
        dbn_kernel,
        out_shape=jax.ShapeDtypeStruct((B, LANES), jnp.float32),
        grid=grid,
        in_specs=[
            pl.BlockSpec((TB, LANES), lambda i: (i, 0)),          # input tile
            pl.BlockSpec((4, TB, LANES), lambda i: (0, i, 0)),    # random tile
            pl.BlockSpec((SLAB_ROWS, LANES), lambda i: (0, 0)),   # packed params
        ],
        out_specs=pl.BlockSpec((TB, LANES), lambda i: (i, 0)),
        compiler_params=pltpu.CompilerParams(
            dimension_semantics=("parallel",)),
    )(x_pad, rand, param_slab)

    return out[:, :BP_OUT]


if __name__ == "__main__":
    key = jax.random.PRNGKey(0)
    pkey, xkey, rkey = jax.random.split(key, 3)
    params = init_params(pkey)
    slab = pack_params(params)

    # small deterministic input: (batch, C, H, W) = (8, 1, 2, 2) -> flattens to (8, 4)
    x = jax.random.uniform(xkey, (8, 1, 2, 2), dtype=jnp.float32)

    out = dbn_forward(x, slab, rkey)
    out = jax.block_until_ready(out)
    assert out.shape == (8, 3) and out.dtype == jnp.float32
    assert bool(jnp.all(jnp.isfinite(out)))
    print("KERNEL_OK")
</pallas_src>

<mosaic_0001>
module attributes {stable_mosaic.version = 11 : i64} {
  func.func @dbn_kernel(%arg0: i32, %arg1: memref<8x128xf32, #tpu.memory_space<vmem>>, %arg2: memref<4x8x128xf32, #tpu.memory_space<vmem>>, %arg3: memref<680x128xf32, #tpu.memory_space<vmem>>, %arg4: memref<8x128xf32, #tpu.memory_space<vmem>>) attributes {dimension_semantics = [#tpu.dimension_semantics<parallel>], iteration_bounds = array<i64: 1>, scalar_prefetch = 0 : i64, scratch_operands = 0 : i64, tpu.core_type = #tpu.core_type<tc>, window_params = [{transform_indices = @transform_0, window_bounds = array<i64: 8, 128>}, {transform_indices = @transform_1, window_bounds = array<i64: 4, 8, 128>}, {pipeline_mode = #tpu.pipeline_mode<synchronous>, transform_indices = @transform_2, window_bounds = array<i64: 680, 128>}, {transform_indices = @transform_3, window_bounds = array<i64: 8, 128>}]} {
    %c0 = arith.constant 0 : index
    %c0_0 = arith.constant 0 : index
    %0 = vector.load %arg1[%c0, %c0_0] : memref<8x128xf32, #tpu.memory_space<vmem>>, vector<8x128xf32>
    %c0_1 = arith.constant 0 : index
    %c0_2 = arith.constant 0 : index
    %1 = vector.load %arg3[%c0_1, %c0_2] : memref<680x128xf32, #tpu.memory_space<vmem>>, vector<128x128xf32>
    %cst = arith.constant dense<0.000000e+00> : vector<8x128xf32>
    %2 = tpu.matmul %0, %1, %cst {dimension_numbers = #tpu.dot_dimension_numbers<[1], [0], [0], [1], [0, 0, 1, 1], [], []>} : vector<8x128xf32>, vector<128x128xf32>, vector<8x128xf32> -> vector<8x128xf32>
    %c128 = arith.constant 128 : index
    %c0_3 = arith.constant 0 : index
    %3 = vector.load %arg3[%c128, %c0_3] : memref<680x128xf32, #tpu.memory_space<vmem>>, vector<1x128xf32>
    %4 = vector.broadcast %3 : vector<1x128xf32> to vector<8x128xf32>
    %5 = arith.addf %2, %4 : vector<8x128xf32>
    %cst_4 = arith.constant 0.000000e+00 : f32
    %6 = vector.broadcast %cst_4 : f32 to vector<8x128xf32>
    %7 = arith.subf %6, %5 : vector<8x128xf32>
    %8 = math.exp %7 : vector<8x128xf32>
    %cst_5 = arith.constant 1.000000e+00 : f32
    %9 = vector.broadcast %cst_5 : f32 to vector<8x128xf32>
    %10 = arith.addf %9, %8 : vector<8x128xf32>
    %cst_6 = arith.constant 1.000000e+00 : f32
    %11 = vector.broadcast %cst_6 : f32 to vector<8x128xf32>
    %12 = arith.divf %11, %10 : vector<8x128xf32>
    %c0_7 = arith.constant 0 : index
    %c0_8 = arith.constant 0 : index
    %c0_9 = arith.constant 0 : index
    %13 = vector.load %arg2[%c0_7, %c0_8, %c0_9] : memref<4x8x128xf32, #tpu.memory_space<vmem>>, vector<1x8x128xf32>
    %14 = vector.shape_cast %13 : vector<1x8x128xf32> to vector<8x128xf32>
    %15 = arith.cmpf olt, %14, %12 : vector<8x128xf32>
    %16 = arith.extui %15 : vector<8x128xi1> to vector<8x128xi32>
    %17 = arith.sitofp %16 : vector<8x128xi32> to vector<8x128xf32>
    %c136 = arith.constant 136 : index
    %c0_10 = arith.constant 0 : index
    %18 = vector.load %arg3[%c136, %c0_10] : memref<680x128xf32, #tpu.memory_space<vmem>>, vector<128x128xf32>
    %cst_11 = arith.constant dense<0.000000e+00> : vector<8x128xf32>
    %19 = tpu.matmul %17, %18, %cst_11 {dimension_numbers = #tpu.dot_dimension_numbers<[1], [0], [0], [1], [0, 0, 1, 1], [], []>} : vector<8x128xf32>, vector<128x128xf32>, vector<8x128xf32> -> vector<8x128xf32>
    %c264 = arith.constant 264 : index
    %c0_12 = arith.constant 0 : index
    %20 = vector.load %arg3[%c264, %c0_12] : memref<680x128xf32, #tpu.memory_space<vmem>>, vector<1x128xf32>
    %21 = vector.broadcast %20 : vector<1x128xf32> to vector<8x128xf32>
    %22 = arith.addf %19, %21 : vector<8x128xf32>
    %cst_13 = arith.constant 0.000000e+00 : f32
    %23 = vector.broadcast %cst_13 : f32 to vector<8x128xf32>
    %24 = arith.subf %23, %22 : vector<8x128xf32>
    %25 = math.exp %24 : vector<8x128xf32>
    %cst_14 = arith.constant 1.000000e+00 : f32
    %26 = vector.broadcast %cst_14 : f32 to vector<8x128xf32>
    %27 = arith.addf %26, %25 : vector<8x128xf32>
    %cst_15 = arith.constant 1.000000e+00 : f32
    %28 = vector.broadcast %cst_15 : f32 to vector<8x128xf32>
    %29 = arith.divf %28, %27 : vector<8x128xf32>
    %c1 = arith.constant 1 : index
    %c0_16 = arith.constant 0 : index
    %c0_17 = arith.constant 0 : index
    %30 = vector.load %arg2[%c1, %c0_16, %c0_17] : memref<4x8x128xf32, #tpu.memory_space<vmem>>, vector<1x8x128xf32>
    %31 = vector.shape_cast %30 : vector<1x8x128xf32> to vector<8x128xf32>
    %32 = arith.cmpf olt, %31, %29 : vector<8x128xf32>
    %33 = arith.extui %32 : vector<8x128xi1> to vector<8x128xi32>
    %34 = arith.sitofp %33 : vector<8x128xi32> to vector<8x128xf32>
    %c272 = arith.constant 272 : index
    %c0_18 = arith.constant 0 : index
    %35 = vector.load %arg3[%c272, %c0_18] : memref<680x128xf32, #tpu.memory_space<vmem>>, vector<128x128xf32>
    %cst_19 = arith.constant dense<0.000000e+00> : vector<8x128xf32>
    %36 = tpu.matmul %34, %35, %cst_19 {dimension_numbers = #tpu.dot_dimension_numbers<[1], [0], [0], [1], [0, 0, 1, 1], [], []>} : vector<8x128xf32>, vector<128x128xf32>, vector<8x128xf32> -> vector<8x128xf32>
    %c400 = arith.constant 400 : index
    %c0_20 = arith.constant 0 : index
    %37 = vector.load %arg3[%c400, %c0_20] : memref<680x128xf32, #tpu.memory_space<vmem>>, vector<1x128xf32>
    %38 = vector.broadcast %37 : vector<1x128xf32> to vector<8x128xf32>
    %39 = arith.addf %36, %38 : vector<8x128xf32>
    %cst_21 = arith.constant 0.000000e+00 : f32
    %40 = vector.broadcast %cst_21 : f32 to vector<8x128xf32>
    %41 = arith.subf %40, %39 : vector<8x128xf32>
    %42 = math.exp %41 : vector<8x128xf32>
    %cst_22 = arith.constant 1.000000e+00 : f32
    %43 = vector.broadcast %cst_22 : f32 to vector<8x128xf32>
    %44 = arith.addf %43, %42 : vector<8x128xf32>
    %cst_23 = arith.constant 1.000000e+00 : f32
    %45 = vector.broadcast %cst_23 : f32 to vector<8x128xf32>
    %46 = arith.divf %45, %44 : vector<8x128xf32>
    %c408 = arith.constant 408 : index
    %c0_24 = arith.constant 0 : index
    %47 = vector.load %arg3[%c408, %c0_24] : memref<680x128xf32, #tpu.memory_space<vmem>>, vector<128x128xf32>
    %cst_25 = arith.constant dense<0.000000e+00> : vector<8x128xf32>
    %48 = tpu.matmul %46, %47, %cst_25 {dimension_numbers = #tpu.dot_dimension_numbers<[1], [0], [0], [1], [0, 0, 1, 1], [], []>} : vector<8x128xf32>, vector<128x128xf32>, vector<8x128xf32> -> vector<8x128xf32>
    %c536 = arith.constant 536 : index
    %c0_26 = arith.constant 0 : index
    %49 = vector.load %arg3[%c536, %c0_26] : memref<680x128xf32, #tpu.memory_space<vmem>>, vector<1x128xf32>
    %50 = vector.broadcast %49 : vector<1x128xf32> to vector<8x128xf32>
    %51 = arith.addf %48, %50 : vector<8x128xf32>
    %cst_27 = arith.constant 0.000000e+00 : f32
    %52 = vector.broadcast %cst_27 : f32 to vector<8x128xf32>
    %53 = arith.maximumf %51, %52 : vector<8x128xf32>
    %c3 = arith.constant 3 : index
    %c0_28 = arith.constant 0 : index
    %c0_29 = arith.constant 0 : index
    %54 = vector.load %arg2[%c3, %c0_28, %c0_29] : memref<4x8x128xf32, #tpu.memory_space<vmem>>, vector<1x8x128xf32>
    %55 = vector.shape_cast %54 : vector<1x8x128xf32> to vector<8x128xf32>
    %cst_30 = arith.constant 5.000000e-01 : f32
    %56 = vector.broadcast %cst_30 : f32 to vector<8x128xf32>
    %57 = arith.cmpf olt, %55, %56 : vector<8x128xf32>
    %cst_31 = arith.constant 2.000000e+00 : f32
    %cst_32 = arith.constant 0.000000e+00 : f32
    %58 = vector.broadcast %cst_31 : f32 to vector<8x128xf32>
    %59 = vector.broadcast %cst_32 : f32 to vector<8x128xf32>
    %60 = arith.select %57, %58, %59 : vector<8x128xi1>, vector<8x128xf32>
    %61 = arith.mulf %53, %60 : vector<8x128xf32>
    %c544 = arith.constant 544 : index
    %c0_33 = arith.constant 0 : index
    %62 = vector.load %arg3[%c544, %c0_33] : memref<680x128xf32, #tpu.memory_space<vmem>>, vector<128x128xf32>
    %cst_34 = arith.constant dense<0.000000e+00> : vector<8x128xf32>
    %63 = tpu.matmul %61, %62, %cst_34 {dimension_numbers = #tpu.dot_dimension_numbers<[1], [0], [0], [1], [0, 0, 1, 1], [], []>} : vector<8x128xf32>, vector<128x128xf32>, vector<8x128xf32> -> vector<8x128xf32>
    %c672 = arith.constant 672 : index
    %c0_35 = arith.constant 0 : index
    %64 = vector.load %arg3[%c672, %c0_35] : memref<680x128xf32, #tpu.memory_space<vmem>>, vector<1x128xf32>
    %65 = vector.broadcast %64 : vector<1x128xf32> to vector<8x128xf32>
    %66 = arith.addf %63, %65 : vector<8x128xf32>
    %c0_36 = arith.constant 0 : index
    %c0_37 = arith.constant 0 : index
    %67 = vector.load %arg4[%c0_36, %c0_37] : memref<8x128xf32, #tpu.memory_space<vmem>>, vector<8x128xf32>
    tpu.vector_store %arg4[%c0_36, %c0_37], %66 {strides = array<i32>} : memref<8x128xf32, #tpu.memory_space<vmem>>, vector<8x128xf32>,
    return
  }
  func.func @transform_0(%arg0: i32) -> (i32, i32) {
    %c0_i32 = arith.constant 0 : i32
    %c0_i32_0 = arith.constant 0 : i32
    return %arg0, %c0_i32 : i32, i32
  }
  func.func @transform_1(%arg0: i32) -> (i32, i32, i32) {
    %c0_i32 = arith.constant 0 : i32
    %c0_i32_0 = arith.constant 0 : i32
    %c0_i32_1 = arith.constant 0 : i32
    return %c0_i32, %arg0, %c0_i32_0 : i32, i32, i32
  }
  func.func @transform_2(%arg0: i32) -> (i32, i32) {
    %c0_i32 = arith.constant 0 : i32
    %c0_i32_0 = arith.constant 0 : i32
    %c0_i32_1 = arith.constant 0 : i32
    return %c0_i32, %c0_i32_0 : i32, i32
  }
  func.func @transform_3(%arg0: i32) -> (i32, i32) {
    %c0_i32 = arith.constant 0 : i32
    %c0_i32_0 = arith.constant 0 : i32
    return %arg0, %c0_i32 : i32, i32
  }
}

</mosaic_0001>

<llo_original>
// kernel: tpu_custom_call.1
$region0: #{tpu_custom_call.1}
  #allocation0 [shape = 'u32[]', space=smem, size = 0x4, offset = 0x4, fixed_abs, tag = 'smem constant byte address 0x4 - core index']
  #allocation1 [shape = 'u32[144,128]{1,0:T(1,128)}', space=vmem, size = 0x12000, scoped, tag = 'internal scratch']
  %s0 = inlined_call_operand.hbm [shape: f32[8,128], index: 0, kind: input, shape index: {}]
  %s1 = inlined_call_operand.hbm [shape: f32[4,8,128], index: 1, kind: input, shape index: {}]
  %s2 = inlined_call_operand.hbm [shape: f32[680,128], index: 2, kind: input, shape index: {}]
  %s3 = inlined_call_operand.hbm [shape: f32[8,128], index: 3, kind: output, shape index: {}]
  %s4 = sld [smem:[#allocation0]]
  $region34: #{tpu_custom_call.1} parent=0
    _
  %s6 = ssub.s32 1, %s4
  %s7 = scalar_select 0, %s6, %s4
  $region1: #{tpu_custom_call.1} parent=0
    #allocation2 [shape = 'u8[4096]{0}', space=vmem, size = 0x1000, scoped, tag = 'input window, operand 0, single buffered']
    #allocation3 [shape = 's32[1]{0}', space=sflag, size = 0x4, scoped, tag = 'scoped memory for tpu_custom_call.1']
    #allocation4 [shape = 's32[1]{0}', space=sflag, size = 0x4, scoped, tag = 'scoped memory for tpu_custom_call.1']
    #allocation5 [shape = 'u8[16384]{0}', space=vmem, size = 0x4000, scoped, tag = 'input window, operand 1, single buffered']
    #allocation6 [shape = 's32[1]{0}', space=sflag, size = 0x4, scoped, tag = 'scoped memory for tpu_custom_call.1']
    #allocation7 [shape = 'u8[348160]{0}', space=vmem, size = 0x55000, scoped, tag = 'input window, operand 2, single buffered']
    #allocation8 [shape = 'u8[4096]{0}', space=vmem, size = 0x1000, scoped, tag = 'output window, operand 0, single buffered']
    %8 = vsyncpa [#allocation3], 0
    %9 = vsyncpa [#allocation6], 0
    %10 = vsyncpa [#allocation4], 0
    // Predicated region
    $region2: #{tpu_custom_call.1} parent=1 // pred_check
      _
    $region3: #{tpu_custom_call.1} parent=1 // pred_check_branch
      %12 = sbr.rel (0) target = $region5
    $region4: #{tpu_custom_call.1} parent=1 // pred_region
      %s14 = ssub.s32 128, 128
      %15 = vsyncadd [#allocation3], %s14
      %s17 = sshll.u32 [#allocation2], 4
      %s18 = int_to_ptr.vmem [resolvable:$true] %s17
      %20 = dma.hbm_to_vmem [thread:$0]  %s0, 128, %s18, [#allocation3]
    $region5: #{tpu_custom_call.1} parent=1 // pred_fallthru
      _
    // Predicated region
    $region6: #{tpu_custom_call.1} parent=1 // pred_check
      _
    $region7: #{tpu_custom_call.1} parent=1 // pred_check_branch
      %22 = sbr.rel (0) target = $region9
    $region8: #{tpu_custom_call.1} parent=1 // pred_region
      %s24 = ssub.s32 512, 512
      %25 = vsyncadd [#allocation6], %s24
      %s26 = sshll.u32 [#allocation5], 4
      %s27 = int_to_ptr.vmem [resolvable:$true] %s26
      %32 = dma.hbm_to_vmem [thread:$0]  %s1, 512, %s27, [#allocation6], 128, 128, 8
    $region9: #{tpu_custom_call.1} parent=1 // pred_fallthru
      _
    // Predicated region
    $region10: #{tpu_custom_call.1} parent=1 // pred_check
      _
    $region11: #{tpu_custom_call.1} parent=1 // pred_check_branch
      %34 = sbr.rel (0) target = $region13
    $region12: #{tpu_custom_call.1} parent=1 // pred_region
      %s36 = ssub.s32 10880, 10880
      %37 = vsyncadd [#allocation6], %s36
      %s38 = sshll.u32 [#allocation7], 4
      %s39 = int_to_ptr.vmem [resolvable:$true] %s38
      %44 = dma.hbm_to_vmem [thread:$0]  %s2, 10880, %s39, [#allocation6], 128, 128, 8
    $region13: #{tpu_custom_call.1} parent=1 // pred_fallthru
      _
    // Predicated region
    $region14: #{tpu_custom_call.1} parent=1 // pred_check
      _
    $region15: #{tpu_custom_call.1} parent=1 // pred_check_branch
      %46 = sbr.rel (0) target = $region17
    $region16: #{tpu_custom_call.1} parent=1 // pred_region
      %47 = dma.done [#allocation3], 128
    $region17: #{tpu_custom_call.1} parent=1 // pred_fallthru
      _
    // Predicated region
    $region18: #{tpu_custom_call.1} parent=1 // pred_check
      _
    $region19: #{tpu_custom_call.1} parent=1 // pred_check_branch
      %49 = sbr.rel (0) target = $region21
    $region20: #{tpu_custom_call.1} parent=1 // pred_region
      %50 = dma.done [#allocation6], 512
    $region21: #{tpu_custom_call.1} parent=1 // pred_fallthru
      _
    // Predicated region
    $region22: #{tpu_custom_call.1} parent=1 // pred_check
      _
    $region23: #{tpu_custom_call.1} parent=1 // pred_check_branch
      %52 = sbr.rel (0) target = $region25
    $region24: #{tpu_custom_call.1} parent=1 // pred_region
      %53 = dma.done [#allocation6], 10880
    $region25: #{tpu_custom_call.1} parent=1 // pred_fallthru
      _
    %v54 = vld [vmem:[#allocation2] sm:$0xff]
    %v55 = vld [vmem:[#allocation7] sm:$0xff]
    %v56 = vld [vmem:[#allocation7 + $0x8] sm:$0xff]
    %v57 = vld [vmem:[#allocation7 + $0x10] sm:$0xff]
    %v58 = vld [vmem:[#allocation7 + $0x18] sm:$0xff]
    %v59 = vld [vmem:[#allocation7 + $0x20] sm:$0xff]
    %v60 = vld [vmem:[#allocation7 + $0x28] sm:$0xff]
    %v61 = vld [vmem:[#allocation7 + $0x30] sm:$0xff]
    %v62 = vld [vmem:[#allocation7 + $0x38] sm:$0xff]
    %v63 = vld [vmem:[#allocation7 + $0x40] sm:$0xff]
    %v64 = vld [vmem:[#allocation7 + $0x48] sm:$0xff]
    %v65 = vld [vmem:[#allocation7 + $0x50] sm:$0xff]
    %v66 = vld [vmem:[#allocation7 + $0x58] sm:$0xff]
    %v67 = vld [vmem:[#allocation7 + $0x60] sm:$0xff]
    %v68 = vld [vmem:[#allocation7 + $0x68] sm:$0xff]
    %v69 = vld [vmem:[#allocation7 + $0x70] sm:$0xff]
    %v70 = vld [vmem:[#allocation7 + $0x78] sm:$0xff]
    %v71 = vld [vmem:[#allocation7 + $0x80] sm:$0x1]
    %v72 = vlaneseq
    %v73 = vshrl.u32 %v72, 7
    %v74 = vsub.s32 0, %v73
    %v75 = vrot.slane %v71, %v74
    %76 = vmatprep.subr.mxu0 0.0
    %77 = vmatpush1.msra.mxu0 %v55
    %78 = vmatprep.subr.mxu0 0.0
    %79 = vmatpush1.msra.mxu0 %v56
    %80 = vmatprep.subr.mxu0 0.0
    %81 = vmatpush1.msra.mxu0 %v57
    %82 = vmatprep.subr.mxu0 0.0
    %83 = vmatpush1.msra.mxu0 %v58
    %84 = vmatprep.subr.mxu0 0.0
    %85 = vmatpush1.msra.mxu0 %v59
    %86 = vmatprep.subr.mxu0 0.0
    %87 = vmatpush1.msra.mxu0 %v60
    %88 = vmatprep.subr.mxu0 0.0
    %89 = vmatpush1.msra.mxu0 %v61
    %90 = vmatprep.subr.mxu0 0.0
    %91 = vmatpush1.msra.mxu0 %v62
    %92 = vmatprep.subr.mxu0 0.0
    %93 = vmatpush1.msra.mxu0 %v63
    %94 = vmatprep.subr.mxu0 0.0
    %95 = vmatpush1.msra.mxu0 %v64
    %96 = vmatprep.subr.mxu0 0.0
    %97 = vmatpush1.msra.mxu0 %v65
    %98 = vmatprep.subr.mxu0 0.0
    %99 = vmatpush1.msra.mxu0 %v66
    %100 = vmatprep.subr.mxu0 0.0
    %101 = vmatpush1.msra.mxu0 %v67
    %102 = vmatprep.subr.mxu0 0.0
    %103 = vmatpush1.msra.mxu0 %v68
    %104 = vmatprep.subr.mxu0 0.0
    %105 = vmatpush1.msra.mxu0 %v69
    %106 = vmatprep.subr.mxu0 0.0
    %107 = vmatpush1.msra.mxu0 %v70
    %108 = vmatprep.subr.mxu0 0.0
    %109 = vmatpush1.msra.mxu0 0.0
    %110 = vmatprep.subr.mxu0 0.0
    %111 = vmatpush1.msra.mxu0 0.0
    %112 = vmatprep.subr.mxu0 0.0
    %113 = vmatpush1.msra.mxu0 0.0
    %114 = vmatprep.subr.mxu0 0.0
    %115 = vmatpush1.msra.mxu0 0.0
    %116 = vmatprep.subr.mxu0 0.0
    %117 = vmatpush1.msra.mxu0 0.0
    %118 = vmatprep.subr.mxu0 0.0
    %119 = vmatpush1.msra.mxu0 0.0
    %120 = vmatprep.subr.mxu0 0.0
    %121 = vmatpush1.msra.mxu0 0.0
    %122 = vmatprep.subr.mxu0 0.0
    %123 = vmatpush1.msra.mxu0 0.0
    %124 = vmatprep.subr.mxu0 0.0
    %125 = vmatpush1.msra.mxu0 0.0
    %126 = vmatprep.subr.mxu0 0.0
    %127 = vmatpush1.msra.mxu0 0.0
    %128 = vmatprep.subr.mxu0 0.0
    %129 = vmatpush1.msra.mxu0 0.0
    %130 = vmatprep.subr.mxu0 0.0
    %131 = vmatpush1.msra.mxu0 0.0
    %132 = vmatprep.subr.mxu0 0.0
    %133 = vmatpush1.msra.mxu0 0.0
    %134 = vmatprep.subr.mxu0 0.0
    %135 = vmatpush1.msra.mxu0 0.0
    %136 = vmatprep.subr.mxu0 0.0
    %137 = vmatpush1.msra.mxu0 0.0
    %138 = vmatprep.subr.mxu0 0.0
    %139 = vmatpush1.msra.mxu0 0.0
    %140 = vmatprep.mubr.f32.mxu0 0.0
    %141 = vmatmul.mubr.f32.gmra.mrb[0].mxu0 %v54
    %v142 = vpop.f32.mrb[0].mxu0
    %v143 = vadd.f32 %v75, %v142
    %v144 = vpop.f32.mrb[0].mxu0
    %145 = vdwg.mxu0
    %v146 = vsub.f32 0.0, %v143
    %v147 = vmul.f32 %v146, 1.442695
    %v148 = vpow.pop %v147
    %v149 = vadd.f32 %v148, 1.0
    %v150 = vrcp.pop %v149
    %v151 = vmul.f32 1.0, %v150
    %v152 = vld [vmem:[#allocation5] sm:$0xff]
    %vm153 = vcmp.lt.f32.partialorder %v152, %v151
    %v154 = vsel %vm153, 1, 0
    %v155 = vcvt.s32.f32 %v154
    %v156 = vld [vmem:[#allocation7 + $0x88] sm:$0xff]
    %v157 = vld [vmem:[#allocation7 + $0x90] sm:$0xff]
    %v158 = vld [vmem:[#allocation7 + $0x98] sm:$0xff]
    %v159 = vld [vmem:[#allocation7 + $0xa0] sm:$0xff]
    %v160 = vld [vmem:[#allocation7 + $0xa8] sm:$0xff]
    %v161 = vld [vmem:[#allocation7 + $0xb0] sm:$0xff]
    %v162 = vld [vmem:[#allocation7 + $0xb8] sm:$0xff]
    %v163 = vld [vmem:[#allocation7 + $0xc0] sm:$0xff]
    %v164 = vld [vmem:[#allocation7 + $0xc8] sm:$0xff]
    %v165 = vld [vmem:[#allocation7 + $0xd0] sm:$0xff]
    %v166 = vld [vmem:[#allocation7 + $0xd8] sm:$0xff]
    %v167 = vld [vmem:[#allocation7 + $0xe0] sm:$0xff]
    %v168 = vld [vmem:[#allocation7 + $0xe8] sm:$0xff]
    %v169 = vld [vmem:[#allocation7 + $0xf0] sm:$0xff]
    %v170 = vld [vmem:[#allocation7 + $0xf8] sm:$0xff]
    %v171 = vld [vmem:[#allocation7 + $0x100] sm:$0xff]
    %v172 = vld [vmem:[#allocation7 + $0x108] sm:$0x1]
    %v173 = vlaneseq
    %v174 = vshrl.u32 %v173, 7
    %v175 = vsub.s32 0, %v174
    %v176 = vrot.slane %v172, %v175
    %177 = vmatprep.subr.mxu0 0.0
    %178 = vmatpush1.msra.mxu0 %v156
    %179 = vmatprep.subr.mxu0 0.0
    %180 = vmatpush1.msra.mxu0 %v157
    %181 = vmatprep.subr.mxu0 0.0
    %182 = vmatpush1.msra.mxu0 %v158
    %183 = vmatprep.subr.mxu0 0.0
    %184 = vmatpush1.msra.mxu0 %v159
    %185 = vmatprep.subr.mxu0 0.0
    %186 = vmatpush1.msra.mxu0 %v160
    %187 = vmatprep.subr.mxu0 0.0
    %188 = vmatpush1.msra.mxu0 %v161
    %189 = vmatprep.subr.mxu0 0.0
    %190 = vmatpush1.msra.mxu0 %v162
    %191 = vmatprep.subr.mxu0 0.0
    %192 = vmatpush1.msra.mxu0 %v163
    %193 = vmatprep.subr.mxu0 0.0
    %194 = vmatpush1.msra.mxu0 %v164
    %195 = vmatprep.subr.mxu0 0.0
    %196 = vmatpush1.msra.mxu0 %v165
    %197 = vmatprep.subr.mxu0 0.0
    %198 = vmatpush1.msra.mxu0 %v166
    %199 = vmatprep.subr.mxu0 0.0
    %200 = vmatpush1.msra.mxu0 %v167
    %201 = vmatprep.subr.mxu0 0.0
    %202 = vmatpush1.msra.mxu0 %v168
    %203 = vmatprep.subr.mxu0 0.0
    %204 = vmatpush1.msra.mxu0 %v169
    %205 = vmatprep.subr.mxu0 0.0
    %206 = vmatpush1.msra.mxu0 %v170
    %207 = vmatprep.subr.mxu0 0.0
    %208 = vmatpush1.msra.mxu0 %v171
    %209 = vmatprep.subr.mxu0 0.0
    %210 = vmatpush1.msra.mxu0 0.0
    %211 = vmatprep.subr.mxu0 0.0
    %212 = vmatpush1.msra.mxu0 0.0
    %213 = vmatprep.subr.mxu0 0.0
    %214 = vmatpush1.msra.mxu0 0.0
    %215 = vmatprep.subr.mxu0 0.0
    %216 = vmatpush1.msra.mxu0 0.0
    %217 = vmatprep.subr.mxu0 0.0
    %218 = vmatpush1.msra.mxu0 0.0
    %219 = vmatprep.subr.mxu0 0.0
    %220 = vmatpush1.msra.mxu0 0.0
    %221 = vmatprep.subr.mxu0 0.0
    %222 = vmatpush1.msra.mxu0 0.0
    %223 = vmatprep.subr.mxu0 0.0
    %224 = vmatpush1.msra.mxu0 0.0
    %225 = vmatprep.subr.mxu0 0.0
    %226 = vmatpush1.msra.mxu0 0.0
    %227 = vmatprep.subr.mxu0 0.0
    %228 = vmatpush1.msra.mxu0 0.0
    %229 = vmatprep.subr.mxu0 0.0
    %230 = vmatpush1.msra.mxu0 0.0
    %231 = vmatprep.subr.mxu0 0.0
    %232 = vmatpush1.msra.mxu0 0.0
    %233 = vmatprep.subr.mxu0 0.0
    %234 = vmatpush1.msra.mxu0 0.0
    %235 = vmatprep.subr.mxu0 0.0
    %236 = vmatpush1.msra.mxu0 0.0
    %237 = vmatprep.subr.mxu0 0.0
    %238 = vmatpush1.msra.mxu0 0.0
    %239 = vmatprep.subr.mxu0 0.0
    %240 = vmatpush1.msra.mxu0 0.0
    %241 = vmatprep.mubr.f32.mxu0 0.0
    %242 = vmatmul.mubr.f32.gmra.mrb[0].mxu0 %v155
    %v243 = vpop.f32.mrb[0].mxu0
    %v244 = vadd.f32 %v176, %v243
    %v245 = vpop.f32.mrb[0].mxu0
    %246 = vdwg.mxu0
    %v247 = vsub.f32 0.0, %v244
    %v248 = vmul.f32 %v247, 1.442695
    %v249 = vpow.pop %v248
    %v250 = vadd.f32 %v249, 1.0
    %v251 = vrcp.pop %v250
    %v252 = vmul.f32 1.0, %v251
    %s253 = scalar_lea.vmem [#allocation5], 8
    %v254 = vld [vmem:[%s253] sm:$0xff]
    %vm255 = vcmp.lt.f32.partialorder %v254, %v252
    %v256 = vsel %vm255, 1, 0
    %v257 = vcvt.s32.f32 %v256
    %v258 = vld [vmem:[#allocation7 + $0x110] sm:$0xff]
    %v259 = vld [vmem:[#allocation7 + $0x118] sm:$0xff]
    %v260 = vld [vmem:[#allocation7 + $0x120] sm:$0xff]
    %v261 = vld [vmem:[#allocation7 + $0x128] sm:$0xff]
    %v262 = vld [vmem:[#allocation7 + $0x130] sm:$0xff]
    %v263 = vld [vmem:[#allocation7 + $0x138] sm:$0xff]
    %v264 = vld [vmem:[#allocation7 + $0x140] sm:$0xff]
    %v265 = vld [vmem:[#allocation7 + $0x148] sm:$0xff]
    %v266 = vld [vmem:[#allocation7 + $0x150] sm:$0xff]
    %v267 = vld [vmem:[#allocation7 + $0x158] sm:$0xff]
    %v268 = vld [vmem:[#allocation7 + $0x160] sm:$0xff]
    %v269 = vld [vmem:[#allocation7 + $0x168] sm:$0xff]
    %v270 = vld [vmem:[#allocation7 + $0x170] sm:$0xff]
    %v271 = vld [vmem:[#allocation7 + $0x178] sm:$0xff]
    %v272 = vld [vmem:[#allocation7 + $0x180] sm:$0xff]
    %v273 = vld [vmem:[#allocation7 + $0x188] sm:$0xff]
    %v274 = vld [vmem:[#allocation7 + $0x190] sm:$0x1]
    %v275 = vlaneseq
    %v276 = vshrl.u32 %v275, 7
    %v277 = vsub.s32 0, %v276
    %v278 = vrot.slane %v274, %v277
    %279 = vmatprep.subr.mxu0 0.0
    %280 = vmatpush1.msra.mxu0 %v258
    %281 = vmatprep.subr.mxu0 0.0
    %282 = vmatpush1.msra.mxu0 %v259
    %283 = vmatprep.subr.mxu0 0.0
    %284 = vmatpush1.msra.mxu0 %v260
    %285 = vmatprep.subr.mxu0 0.0
    %286 = vmatpush1.msra.mxu0 %v261
    %287 = vmatprep.subr.mxu0 0.0
    %288 = vmatpush1.msra.mxu0 %v262
    %289 = vmatprep.subr.mxu0 0.0
    %290 = vmatpush1.msra.mxu0 %v263
    %291 = vmatprep.subr.mxu0 0.0
    %292 = vmatpush1.msra.mxu0 %v264
    %293 = vmatprep.subr.mxu0 0.0
    %294 = vmatpush1.msra.mxu0 %v265
    %295 = vmatprep.subr.mxu0 0.0
    %296 = vmatpush1.msra.mxu0 %v266
    %297 = vmatprep.subr.mxu0 0.0
    %298 = vmatpush1.msra.mxu0 %v267
    %299 = vmatprep.subr.mxu0 0.0
    %300 = vmatpush1.msra.mxu0 %v268
    %301 = vmatprep.subr.mxu0 0.0
    %302 = vmatpush1.msra.mxu0 %v269
    %303 = vmatprep.subr.mxu0 0.0
    %304 = vmatpush1.msra.mxu0 %v270
    %305 = vmatprep.subr.mxu0 0.0
    %306 = vmatpush1.msra.mxu0 %v271
    %307 = vmatprep.subr.mxu0 0.0
    %308 = vmatpush1.msra.mxu0 %v272
    %309 = vmatprep.subr.mxu0 0.0
    %310 = vmatpush1.msra.mxu0 %v273
    %311 = vmatprep.subr.mxu0 0.0
    %312 = vmatpush1.msra.mxu0 0.0
    %313 = vmatprep.subr.mxu0 0.0
    %314 = vmatpush1.msra.mxu0 0.0
    %315 = vmatprep.subr.mxu0 0.0
    %316 = vmatpush1.msra.mxu0 0.0
    %317 = vmatprep.subr.mxu0 0.0
    %318 = vmatpush1.msra.mxu0 0.0
    %319 = vmatprep.subr.mxu0 0.0
    %320 = vmatpush1.msra.mxu0 0.0
    %321 = vmatprep.subr.mxu0 0.0
    %322 = vmatpush1.msra.mxu0 0.0
    %323 = vmatprep.subr.mxu0 0.0
    %324 = vmatpush1.msra.mxu0 0.0
    %325 = vmatprep.subr.mxu0 0.0
    %326 = vmatpush1.msra.mxu0 0.0
    %327 = vmatprep.subr.mxu0 0.0
    %328 = vmatpush1.msra.mxu0 0.0
    %329 = vmatprep.subr.mxu0 0.0
    %330 = vmatpush1.msra.mxu0 0.0
    %331 = vmatprep.subr.mxu0 0.0
    %332 = vmatpush1.msra.mxu0 0.0
    %333 = vmatprep.subr.mxu0 0.0
    %334 = vmatpush1.msra.mxu0 0.0
    %335 = vmatprep.subr.mxu0 0.0
    %336 = vmatpush1.msra.mxu0 0.0
    %337 = vmatprep.subr.mxu0 0.0
    %338 = vmatpush1.msra.mxu0 0.0
    %339 = vmatprep.subr.mxu0 0.0
    %340 = vmatpush1.msra.mxu0 0.0
    %341 = vmatprep.subr.mxu0 0.0
    %342 = vmatpush1.msra.mxu0 0.0
    %343 = vmatprep.mubr.f32.mxu0 0.0
    %344 = vmatmul.mubr.f32.gmra.mrb[0].mxu0 %v257
    %v345 = vpop.f32.mrb[0].mxu0
    %v346 = vadd.f32 %v278, %v345
    %v347 = vpop.f32.mrb[0].mxu0
    %348 = vdwg.mxu0
    %v349 = vsub.f32 0.0, %v346
    %v350 = vmul.f32 %v349, 1.442695
    %v351 = vpow.pop %v350
    %v352 = vadd.f32 %v351, 1.0
    %v353 = vrcp.pop %v352
    %v354 = vmul.f32 1.0, %v353
    %v355 = vld [vmem:[#allocation7 + $0x198] sm:$0xff]
    %v356 = vld [vmem:[#allocation7 + $0x1a0] sm:$0xff]
    %v357 = vld [vmem:[#allocation7 + $0x1a8] sm:$0xff]
    %v358 = vld [vmem:[#allocation7 + $0x1b0] sm:$0xff]
    %v359 = vld [vmem:[#allocation7 + $0x1b8] sm:$0xff]
    %v360 = vld [vmem:[#allocation7 + $0x1c0] sm:$0xff]
    %v361 = vld [vmem:[#allocation7 + $0x1c8] sm:$0xff]
    %v362 = vld [vmem:[#allocation7 + $0x1d0] sm:$0xff]
    %v363 = vld [vmem:[#allocation7 + $0x1d8] sm:$0xff]
    %v364 = vld [vmem:[#allocation7 + $0x1e0] sm:$0xff]
    %v365 = vld [vmem:[#allocation7 + $0x1e8] sm:$0xff]
    %v366 = vld [vmem:[#allocation7 + $0x1f0] sm:$0xff]
    %v367 = vld [vmem:[#allocation7 + $0x1f8] sm:$0xff]
    %v368 = vld [vmem:[#allocation7 + $0x200] sm:$0xff]
    %v369 = vld [vmem:[#allocation7 + $0x208] sm:$0xff]
    %v370 = vld [vmem:[#allocation7 + $0x210] sm:$0xff]
    %v371 = vld [vmem:[#allocation7 + $0x218] sm:$0x1]
    %v372 = vlaneseq
    %v373 = vshrl.u32 %v372, 7
    %v374 = vsub.s32 0, %v373
    %v375 = vrot.slane %v371, %v374
    %376 = vmatprep.subr.mxu0 0.0
    %377 = vmatpush1.msra.mxu0 %v355
    %378 = vmatprep.subr.mxu0 0.0
    %379 = vmatpush1.msra.mxu0 %v356
    %380 = vmatprep.subr.mxu0 0.0
    %381 = vmatpush1.msra.mxu0 %v357
    %382 = vmatprep.subr.mxu0 0.0
    %383 = vmatpush1.msra.mxu0 %v358
    %384 = vmatprep.subr.mxu0 0.0
    %385 = vmatpush1.msra.mxu0 %v359
    %386 = vmatprep.subr.mxu0 0.0
    %387 = vmatpush1.msra.mxu0 %v360
    %388 = vmatprep.subr.mxu0 0.0
    %389 = vmatpush1.msra.mxu0 %v361
    %390 = vmatprep.subr.mxu0 0.0
    %391 = vmatpush1.msra.mxu0 %v362
    %392 = vmatprep.subr.mxu0 0.0
    %393 = vmatpush1.msra.mxu0 %v363
    %394 = vmatprep.subr.mxu0 0.0
    %395 = vmatpush1.msra.mxu0 %v364
    %396 = vmatprep.subr.mxu0 0.0
    %397 = vmatpush1.msra.mxu0 %v365
    %398 = vmatprep.subr.mxu0 0.0
    %399 = vmatpush1.msra.mxu0 %v366
    %400 = vmatprep.subr.mxu0 0.0
    %401 = vmatpush1.msra.mxu0 %v367
    %402 = vmatprep.subr.mxu0 0.0
    %403 = vmatpush1.msra.mxu0 %v368
    %404 = vmatprep.subr.mxu0 0.0
    %405 = vmatpush1.msra.mxu0 %v369
    %406 = vmatprep.subr.mxu0 0.0
    %407 = vmatpush1.msra.mxu0 %v370
    %408 = vmatprep.subr.mxu0 0.0
    %409 = vmatpush1.msra.mxu0 0.0
    %410 = vmatprep.subr.mxu0 0.0
    %411 = vmatpush1.msra.mxu0 0.0
    %412 = vmatprep.subr.mxu0 0.0
    %413 = vmatpush1.msra.mxu0 0.0
    %414 = vmatprep.subr.mxu0 0.0
    %415 = vmatpush1.msra.mxu0 0.0
    %416 = vmatprep.subr.mxu0 0.0
    %417 = vmatpush1.msra.mxu0 0.0
    %418 = vmatprep.subr.mxu0 0.0
    %419 = vmatpush1.msra.mxu0 0.0
    %420 = vmatprep.subr.mxu0 0.0
    %421 = vmatpush1.msra.mxu0 0.0
    %422 = vmatprep.subr.mxu0 0.0
    %423 = vmatpush1.msra.mxu0 0.0
    %424 = vmatprep.subr.mxu0 0.0
    %425 = vmatpush1.msra.mxu0 0.0
    %426 = vmatprep.subr.mxu0 0.0
    %427 = vmatpush1.msra.mxu0 0.0
    %428 = vmatprep.subr.mxu0 0.0
    %429 = vmatpush1.msra.mxu0 0.0
    %430 = vmatprep.subr.mxu0 0.0
    %431 = vmatpush1.msra.mxu0 0.0
    %432 = vmatprep.subr.mxu0 0.0
    %433 = vmatpush1.msra.mxu0 0.0
    %434 = vmatprep.subr.mxu0 0.0
    %435 = vmatpush1.msra.mxu0 0.0
    %436 = vmatprep.subr.mxu0 0.0
    %437 = vmatpush1.msra.mxu0 0.0
    %438 = vmatprep.subr.mxu0 0.0
    %439 = vmatpush1.msra.mxu0 0.0
    %440 = vmatprep.mubr.f32.mxu0 0.0
    %441 = vmatmul.mubr.f32.gmra.mrb[0].mxu0 %v354
    %v442 = vpop.f32.mrb[0].mxu0
    %v443 = vadd.f32 %v375, %v442
    %v444 = vpop.f32.mrb[0].mxu0
    %445 = vdwg.mxu0
    %v446 = vmax.f32 %v443, 0.0
    %s447 = scalar_lea.vmem [#allocation5], 24
    %v448 = vld [vmem:[%s447] sm:$0xff]
    %vm449 = vcmp.lt.f32.partialorder %v448, 0.5
    %v450 = vsel %vm449, 2.0, 0.0
    %v451 = vmul.f32 %v446, %v450
    %v452 = vld [vmem:[#allocation7 + $0x220] sm:$0xff]
    %v453 = vld [vmem:[#allocation7 + $0x228] sm:$0xff]
    %v454 = vld [vmem:[#allocation7 + $0x230] sm:$0xff]
    %v455 = vld [vmem:[#allocation7 + $0x238] sm:$0xff]
    %v456 = vld [vmem:[#allocation7 + $0x240] sm:$0xff]
    %v457 = vld [vmem:[#allocation7 + $0x248] sm:$0xff]
    %v458 = vld [vmem:[#allocation7 + $0x250] sm:$0xff]
    %v459 = vld [vmem:[#allocation7 + $0x258] sm:$0xff]
    %v460 = vld [vmem:[#allocation7 + $0x260] sm:$0xff]
    %v461 = vld [vmem:[#allocation7 + $0x268] sm:$0xff]
    %v462 = vld [vmem:[#allocation7 + $0x270] sm:$0xff]
    %v463 = vld [vmem:[#allocation7 + $0x278] sm:$0xff]
    %v464 = vld [vmem:[#allocation7 + $0x280] sm:$0xff]
    %v465 = vld [vmem:[#allocation7 + $0x288] sm:$0xff]
    %v466 = vld [vmem:[#allocation7 + $0x290] sm:$0xff]
    %v467 = vld [vmem:[#allocation7 + $0x298] sm:$0xff]
    %v468 = vld [vmem:[#allocation7 + $0x2a0] sm:$0x1]
    %v469 = vlaneseq
    %v470 = vshrl.u32 %v469, 7
    %v471 = vsub.s32 0, %v470
    %v472 = vrot.slane %v468, %v471
    %473 = vmatprep.subr.mxu0 0.0
    %474 = vmatpush1.msra.mxu0 %v452
    %475 = vmatprep.subr.mxu0 0.0
    %476 = vmatpush1.msra.mxu0 %v453
    %477 = vmatprep.subr.mxu0 0.0
    %478 = vmatpush1.msra.mxu0 %v454
    %479 = vmatprep.subr.mxu0 0.0
    %480 = vmatpush1.msra.mxu0 %v455
    %481 = vmatprep.subr.mxu0 0.0
    %482 = vmatpush1.msra.mxu0 %v456
    %483 = vmatprep.subr.mxu0 0.0
    %484 = vmatpush1.msra.mxu0 %v457
    %485 = vmatprep.subr.mxu0 0.0
    %486 = vmatpush1.msra.mxu0 %v458
    %487 = vmatprep.subr.mxu0 0.0
    %488 = vmatpush1.msra.mxu0 %v459
    %489 = vmatprep.subr.mxu0 0.0
    %490 = vmatpush1.msra.mxu0 %v460
    %491 = vmatprep.subr.mxu0 0.0
    %492 = vmatpush1.msra.mxu0 %v461
    %493 = vmatprep.subr.mxu0 0.0
    %494 = vmatpush1.msra.mxu0 %v462
    %495 = vmatprep.subr.mxu0 0.0
    %496 = vmatpush1.msra.mxu0 %v463
    %497 = vmatprep.subr.mxu0 0.0
    %498 = vmatpush1.msra.mxu0 %v464
    %499 = vmatprep.subr.mxu0 0.0
    %500 = vmatpush1.msra.mxu0 %v465
    %501 = vmatprep.subr.mxu0 0.0
    %502 = vmatpush1.msra.mxu0 %v466
    %503 = vmatprep.subr.mxu0 0.0
    %504 = vmatpush1.msra.mxu0 %v467
    %505 = vmatprep.subr.mxu0 0.0
    %506 = vmatpush1.msra.mxu0 0.0
    %507 = vmatprep.subr.mxu0 0.0
    %508 = vmatpush1.msra.mxu0 0.0
    %509 = vmatprep.subr.mxu0 0.0
    %510 = vmatpush1.msra.mxu0 0.0
    %511 = vmatprep.subr.mxu0 0.0
    %512 = vmatpush1.msra.mxu0 0.0
    %513 = vmatprep.subr.mxu0 0.0
    %514 = vmatpush1.msra.mxu0 0.0
    %515 = vmatprep.subr.mxu0 0.0
    %516 = vmatpush1.msra.mxu0 0.0
    %517 = vmatprep.subr.mxu0 0.0
    %518 = vmatpush1.msra.mxu0 0.0
    %519 = vmatprep.subr.mxu0 0.0
    %520 = vmatpush1.msra.mxu0 0.0
    %521 = vmatprep.subr.mxu0 0.0
    %522 = vmatpush1.msra.mxu0 0.0
    %523 = vmatprep.subr.mxu0 0.0
    %524 = vmatpush1.msra.mxu0 0.0
    %525 = vmatprep.subr.mxu0 0.0
    %526 = vmatpush1.msra.mxu0 0.0
    %527 = vmatprep.subr.mxu0 0.0
    %528 = vmatpush1.msra.mxu0 0.0
    %529 = vmatprep.subr.mxu0 0.0
    %530 = vmatpush1.msra.mxu0 0.0
    %531 = vmatprep.subr.mxu0 0.0
    %532 = vmatpush1.msra.mxu0 0.0
    %533 = vmatprep.subr.mxu0 0.0
    %534 = vmatpush1.msra.mxu0 0.0
    %535 = vmatprep.subr.mxu0 0.0
    %536 = vmatpush1.msra.mxu0 0.0
    %537 = vmatprep.mubr.f32.mxu0 0.0
    %538 = vmatmul.mubr.f32.gmra.mrb[0].mxu0 %v451
    %v539 = vpop.f32.mrb[0].mxu0
    %v540 = vadd.f32 %v472, %v539
    %v541 = vpop.f32.mrb[0].mxu0
    %542 = vdwg.mxu0
    %543 = vst [vmem:[#allocation8] sm:$0xff] %v540
    // Predicated region
    $region26: #{tpu_custom_call.1} parent=1 // pred_check
      _
    $region27: #{tpu_custom_call.1} parent=1 // pred_check_branch
      %545 = sbr.rel (0) target = $region29
    $region28: #{tpu_custom_call.1} parent=1 // pred_region
      %s547 = ssub.s32 128, 128
      %548 = vsyncadd [#allocation4], %s547
      %s550 = sshll.u32 [#allocation8], 4
      %s551 = int_to_ptr.vmem [resolvable:$true] %s550
      %553 = dma.vmem_to_hbm [thread:$0]  %s551, 128, %s3, [#allocation4]
    $region29: #{tpu_custom_call.1} parent=1 // pred_fallthru
      _
    // Predicated region
    $region30: #{tpu_custom_call.1} parent=1 // pred_check
      _
    $region31: #{tpu_custom_call.1} parent=1 // pred_check_branch
      %555 = sbr.rel (0) target = $region33
    $region32: #{tpu_custom_call.1} parent=1 // pred_region
      %556 = dma.done [#allocation4], 128
    $region33: #{tpu_custom_call.1} parent=1 // pred_fallthru
      _
    %557 = vsyncpa [#allocation3], 1
    %558 = vsyncpa [#allocation6], 1
    %559 = vsyncpa [#allocation4], 1

</llo_original>
